<compile_context>
chip_gen: v7x
topology: tpu7x:2x2x1
jax: 0.10.0
libtpu: 0.0.40
codegen_flags: <defaults>
</compile_context>

<pallas_src>
import functools
import math

import numpy as np
import jax
import jax.numpy as jnp
from jax.experimental import pallas as pl
from jax.experimental.pallas import tpu as pltpu


def _interp_matrix(in_size: int, out_size: int) -> np.ndarray:
    """(in_size, out_size) matrix A whose column j holds the PyTorch linear
    interpolation weights (align_corners=False) for output sample j, so that
    `x @ A` interpolates the last axis of x.  Columns sum to 1."""
    if in_size == out_size:
        return np.eye(in_size, dtype=np.float32)
    scale = in_size / out_size
    dst = np.arange(out_size, dtype=np.float64)
    src = np.maximum((dst + 0.5) * scale - 0.5, 0.0)
    lo = np.minimum(np.floor(src).astype(np.int64), in_size - 1)
    hi = np.minimum(lo + 1, in_size - 1)
    frac = (src - lo).astype(np.float32)
    a = np.zeros((in_size, out_size), dtype=np.float32)
    cols = np.arange(out_size)
    np.add.at(a, (lo, cols), 1.0 - frac)
    np.add.at(a, (hi, cols), frac)
    return a


def _out_size(in_size: int, scale) -> int:
    s = float(scale)
    if s.is_integer():
        return in_size * int(s)
    # PyTorch uses floor(in_size * scale); epsilon guards 0.1*30 = 2.999... cases.
    return int(math.floor(in_size * s + 1e-7))


def _dsv_fused_kernel(x_ref, m1_ref, bias_ref, m2_ref, o_ref):
    # x_ref   : (1, C_in*D,   H*W)       activation block for this batch element
    # m1_ref  : (C_out*D_o, C_in*D)      kron(conv_w, Ad^T): channel mix + D interp
    # bias_ref: (C_out*D_o, 1)           conv bias replicated over D_o
    # m2_ref  : (H*W, H_o*W_o)           kron(Ah, Aw): H and W interp
    # o_ref   : (1, C_out*D_o, H_o*W_o)
    x = x_ref[0]
    y = jnp.dot(m1_ref[...], x, preferred_element_type=jnp.float32) + bias_ref[...]
    out = jnp.dot(y, m2_ref[...], preferred_element_type=jnp.float32)
    o_ref[0] = out.astype(o_ref.dtype)


def unet_dsv3_forward(x, conv_w, conv_b, scale_factor):
    """Forward of UnetDsv3.

    x:       (N, C_in, D, H, W)  float32
    conv_w:  (C_out, C_in, 1, 1, 1)
    conv_b:  (C_out,)
    """
    n, c_in, d, h, w = x.shape
    c_out = conv_w.shape[0]
    if isinstance(scale_factor, (tuple, list)):
        sd, sh, sw = scale_factor
    else:
        sd = sh = sw = scale_factor
    d_o, h_o, w_o = _out_size(d, sd), _out_size(h, sh), _out_size(w, sw)

    # Tiny interpolation operators (static shapes -> numpy constants at trace time).
    ad = _interp_matrix(d, d_o)          # (D, D_o)
    ah = _interp_matrix(h, h_o)          # (H, H_o)
    aw = _interp_matrix(w, w_o)          # (W, W_o)

    # Fused linear operators (all small relative to the activation tensor).
    w2 = conv_w.reshape(c_out, c_in).astype(jnp.float32)
    m1 = jnp.kron(w2, jnp.asarray(ad.T))                               # (C_out*D_o, C_in*D)
    m2 = jnp.asarray(np.kron(ah, aw))                                  # (H*W, H_o*W_o)
    bias_col = jnp.repeat(conv_b.astype(jnp.float32), d_o)[:, None]    # (C_out*D_o, 1)

    # Free (contiguous) reshape: lanes carry the flattened spatial extent.
    x2d = x.astype(jnp.float32).reshape(n, c_in * d, h * w)

    # VMEM budget: double-buffered per-batch blocks + resident operators + intermediate.
    fb = 4
    est = (2 * (c_in * d * h * w + c_out * d_o * h_o * w_o)
           + 2 * (c_out * d_o * c_in * d + h * w * h_o * w_o)
           + c_out * d_o * h * w) * fb + (2 << 20)
    vmem_limit = int(min(max(est, 16 * 1024 * 1024), 64 * 1024 * 1024))

    out2d = pl.pallas_call(
        _dsv_fused_kernel,
        out_shape=jax.ShapeDtypeStruct((n, c_out * d_o, h_o * w_o), jnp.float32),
        grid=(n,),
        in_specs=[
            pl.BlockSpec((1, c_in * d, h * w), lambda i: (i, 0, 0)),
            pl.BlockSpec((c_out * d_o, c_in * d), lambda i: (0, 0)),
            pl.BlockSpec((c_out * d_o, 1), lambda i: (0, 0)),
            pl.BlockSpec((h * w, h_o * w_o), lambda i: (0, 0)),
        ],
        out_specs=pl.BlockSpec((1, c_out * d_o, h_o * w_o), lambda i: (i, 0, 0)),
        compiler_params=pltpu.CompilerParams(
            dimension_semantics=("parallel",),
            vmem_limit_bytes=vmem_limit,
        ),
    )(x2d, m1, bias_col, m2)

    return out2d.reshape(n, c_out, d_o, h_o, w_o)


def _dsv_reference(x, conv_w, conv_b, scale_factor):
    """Pure-JAX reference: conv3d(k=1) + separable trilinear upsample."""
    n, c_in, d, h, w = x.shape
    c_out = conv_w.shape[0]
    if isinstance(scale_factor, (tuple, list)):
        sd, sh, sw = scale_factor
    else:
        sd = sh = sw = scale_factor
    d_o, h_o, w_o = _out_size(d, sd), _out_size(h, sh), _out_size(w, sw)
    y = jnp.einsum('oc,ncdhw->nodhw', conv_w.reshape(c_out, c_in), x)
    y = y + conv_b[None, :, None, None, None]
    y = jnp.einsum('ncdhw,dD->ncDhw', y, jnp.asarray(_interp_matrix(d, d_o)))
    y = jnp.einsum('ncdhw,hH->ncdHw', y, jnp.asarray(_interp_matrix(h, h_o)))
    y = jnp.einsum('ncdhw,wW->ncdhW', y, jnp.asarray(_interp_matrix(w, w_o)))
    return y


if __name__ == "__main__":
    key = jax.random.PRNGKey(0)
    k1, k2, k3 = jax.random.split(key, 3)

    batch, in_size, out_size = 2, 4, 2
    D = H = W = 4
    scale_factor = 2

    x = jax.random.normal(k1, (batch, in_size, D, H, W), dtype=jnp.float32)
    conv_w = jax.random.normal(k2, (out_size, in_size, 1, 1, 1), dtype=jnp.float32) * 0.1
    conv_b = jax.random.normal(k3, (out_size,), dtype=jnp.float32) * 0.1

    fwd = jax.jit(functools.partial(unet_dsv3_forward, scale_factor=scale_factor))
    out = fwd(x, conv_w, conv_b)
    jax.block_until_ready(out)

    assert out.shape == (batch, out_size, D * scale_factor, H * scale_factor, W * scale_factor)

    ref = _dsv_reference(x, conv_w, conv_b, scale_factor)
    err = float(jnp.max(jnp.abs(out - ref)))
    assert err < 1e-4, f"max abs error vs reference: {err}"

    print("KERNEL_OK")
</pallas_src>

<mosaic_0001>
module attributes {stable_mosaic.version = 11 : i64} {
  func.func @_dsv_fused_kernel(%arg0: i32, %arg1: memref<1x16x16xf32, #tpu.memory_space<vmem>>, %arg2: memref<16x16xf32, #tpu.memory_space<vmem>>, %arg3: memref<16x1xf32, #tpu.memory_space<vmem>>, %arg4: memref<16x64xf32, #tpu.memory_space<vmem>>, %arg5: memref<1x16x64xf32, #tpu.memory_space<vmem>>) attributes {dimension_semantics = [#tpu.dimension_semantics<parallel>], iteration_bounds = array<i64: 2>, scalar_prefetch = 0 : i64, scratch_operands = 0 : i64, tpu.core_type = #tpu.core_type<tc>, window_params = [{transform_indices = @transform_0, window_bounds = array<i64: 1, 16, 16>}, {pipeline_mode = #tpu.pipeline_mode<synchronous>, transform_indices = @transform_1, window_bounds = array<i64: 16, 16>}, {pipeline_mode = #tpu.pipeline_mode<synchronous>, transform_indices = @transform_2, window_bounds = array<i64: 16, 1>}, {pipeline_mode = #tpu.pipeline_mode<synchronous>, transform_indices = @transform_3, window_bounds = array<i64: 16, 64>}, {transform_indices = @transform_4, window_bounds = array<i64: 1, 16, 64>}]} {
    %c0 = arith.constant 0 : index
    %c0_0 = arith.constant 0 : index
    %c0_1 = arith.constant 0 : index
    %0 = vector.load %arg1[%c0, %c0_0, %c0_1] : memref<1x16x16xf32, #tpu.memory_space<vmem>>, vector<1x16x16xf32>
    %1 = vector.shape_cast %0 : vector<1x16x16xf32> to vector<16x16xf32>
    %c0_2 = arith.constant 0 : index
    %c0_3 = arith.constant 0 : index
    %2 = vector.load %arg2[%c0_2, %c0_3] : memref<16x16xf32, #tpu.memory_space<vmem>>, vector<16x16xf32>
    %cst = arith.constant dense<0.000000e+00> : vector<16x16xf32>
    %3 = tpu.matmul %2, %1, %cst {dimension_numbers = #tpu.dot_dimension_numbers<[1], [0], [0], [1], [0, 0, 1, 1], [], []>} : vector<16x16xf32>, vector<16x16xf32>, vector<16x16xf32> -> vector<16x16xf32>
    %c0_4 = arith.constant 0 : index
    %c0_5 = arith.constant 0 : index
    %4 = vector.load %arg3[%c0_4, %c0_5] : memref<16x1xf32, #tpu.memory_space<vmem>>, vector<16x1xf32>
    %5 = vector.broadcast %4 : vector<16x1xf32> to vector<16x16xf32>
    %6 = arith.addf %3, %5 : vector<16x16xf32>
    %c0_6 = arith.constant 0 : index
    %c0_7 = arith.constant 0 : index
    %7 = vector.load %arg4[%c0_6, %c0_7] : memref<16x64xf32, #tpu.memory_space<vmem>>, vector<16x64xf32>
    %cst_8 = arith.constant dense<0.000000e+00> : vector<16x64xf32>
    %8 = tpu.matmul %6, %7, %cst_8 {dimension_numbers = #tpu.dot_dimension_numbers<[1], [0], [0], [1], [0, 0, 1, 1], [], []>} : vector<16x16xf32>, vector<16x64xf32>, vector<16x64xf32> -> vector<16x64xf32>
    %c0_9 = arith.constant 0 : index
    %c0_10 = arith.constant 0 : index
    %c0_11 = arith.constant 0 : index
    %9 = vector.load %arg5[%c0_9, %c0_10, %c0_11] : memref<1x16x64xf32, #tpu.memory_space<vmem>>, vector<1x16x64xf32>
    %10 = vector.shape_cast %9 : vector<1x16x64xf32> to vector<16x64xf32>
    %11 = vector.shape_cast %8 : vector<16x64xf32> to vector<1x16x64xf32>
    tpu.vector_store %arg5[%c0_9, %c0_10, %c0_11], %11 {strides = array<i32>} : memref<1x16x64xf32, #tpu.memory_space<vmem>>, vector<1x16x64xf32>,
    return
  }
  func.func @transform_0(%arg0: i32) -> (i32, i32, i32) {
    %c0_i32 = arith.constant 0 : i32
    %c0_i32_0 = arith.constant 0 : i32
    %c0_i32_1 = arith.constant 0 : i32
    return %arg0, %c0_i32, %c0_i32_0 : i32, i32, i32
  }
  func.func @transform_1(%arg0: i32) -> (i32, i32) {
    %c0_i32 = arith.constant 0 : i32
    %c0_i32_0 = arith.constant 0 : i32
    %c0_i32_1 = arith.constant 0 : i32
    return %c0_i32, %c0_i32_0 : i32, i32
  }
  func.func @transform_2(%arg0: i32) -> (i32, i32) {
    %c0_i32 = arith.constant 0 : i32
    %c0_i32_0 = arith.constant 0 : i32
    %c0_i32_1 = arith.constant 0 : i32
    return %c0_i32, %c0_i32_0 : i32, i32
  }
  func.func @transform_3(%arg0: i32) -> (i32, i32) {
    %c0_i32 = arith.constant 0 : i32
    %c0_i32_0 = arith.constant 0 : i32
    %c0_i32_1 = arith.constant 0 : i32
    return %c0_i32, %c0_i32_0 : i32, i32
  }
  func.func @transform_4(%arg0: i32) -> (i32, i32, i32) {
    %c0_i32 = arith.constant 0 : i32
    %c0_i32_0 = arith.constant 0 : i32
    %c0_i32_1 = arith.constant 0 : i32
    return %arg0, %c0_i32, %c0_i32_0 : i32, i32, i32
  }
}

</mosaic_0001>

<llo_original>
// kernel: unet_dsv3_forward.1
$region0: #{unet_dsv3_forward.1}
  #allocation0 [shape = 'u32[]', space=smem, size = 0x4, offset = 0x4, fixed_abs, tag = 'smem constant byte address 0x4 - core index']
  #allocation1 [shape = 'u32[144,128]{1,0:T(1,128)}', space=vmem, size = 0x12000, scoped, tag = 'internal scratch']
  %s0 = inlined_call_operand.vmem [shape: f32[2,16,16], index: 0, kind: input, shape index: {}]
  %s1 = inlined_call_operand.vmem [shape: f32[16,16], index: 1, kind: input, shape index: {}]
  %s2 = inlined_call_operand.vmem [shape: f32[16,1], index: 2, kind: input, shape index: {}]
  %s3 = inlined_call_operand.vmem [shape: f32[16,64], index: 3, kind: input, shape index: {}]
  %s4 = inlined_call_operand.vmem [shape: f32[2,16,64], index: 4, kind: output, shape index: {}]
  %s5 = sld [smem:[#allocation0]]
  $region49: #{unet_dsv3_forward.1} parent=0
    _
  %s7 = ssub.s32 1, %s5
  %s8 = scalar_select 0, %s7, %s5
  loop: start=0, step=1, limit=4
  $region2: #{unet_dsv3_forward.1} parent=0 // loop_pre_header
    _
  $region3: #{unet_dsv3_forward.1} parent=0 // loop_header
    %s10 = sphi 0, %s14
    %p11 = scmp.ge.s32.totalorder %s10, 4
    %s20 = sphi 0, %s22
    %s23 = sphi 0, %s20
    %s24 = sphi 0, %s23
    %s40 = sphi 0, %s24
    %s44 = sphi 0, %s44
    %s46 = sphi 0, %s44
    %s47 = sphi 0, %s46
    %s61 = sphi 0, %s47
    %s65 = sphi 0, %s65
    %s67 = sphi 0, %s65
    %s68 = sphi 0, %s67
    %s82 = sphi 0, %s68
    %s86 = sphi 0, %s86
    %s88 = sphi 0, %s86
    %s89 = sphi 0, %s88
    %s103 = sphi 0, %s89
    %s109 = sphi 0, %s111
    %s112 = sphi 0, %s109
    %s113 = sphi 0, %s112
    %s129 = sphi 0, %s113
  $region4: #{unet_dsv3_forward.1} parent=0 // loop_header_branch
    %13 = sbr.rel (%p11) target = $region8
  $region5: #{unet_dsv3_forward.1} parent=0 // loop_body
    %s15 = ssub.s32 %s10, 1
    %s16 = ssub.s32 %s10, 2
    %s17 = sadd.s32 %s10, 1
    %s18 = ssub.s32 %s10, %s17
    %p19 = scmp.eq.s32.totalorder %s18, 0
    %s21 = sadd.s32 %s20, 1
    %s22 = scalar_select %p19, %s20, %s21
    %p25 = pneg %p19
    %p26 = scmp.eq.s32.totalorder %s10, 1
    %p27 = por %p25, %p26
    %p28 = scmp.ne.s32.totalorder %s20, %s23
    %p29 = scmp.eq.s32.totalorder %s10, 0
    %p30 = por %p28, %p29
    %p31 = scmp.ne.s32.totalorder %s20, %s23
    %p32 = scmp.eq.s32.totalorder %s15, 1
    %p33 = por %p31, %p32
    %p34 = scmp.ne.s32.totalorder %s23, %s24
    %p35 = scmp.eq.s32.totalorder %s15, 0
    %p36 = por %p34, %p35
    %p37 = scmp.ne.s32.totalorder %s23, %s24
    %p38 = scmp.eq.s32.totalorder %s16, 1
    %p39 = por %p37, %p38
    %p41 = scmp.ne.s32.totalorder %s24, %s40
    %p42 = scmp.eq.s32.totalorder %s16, 0
    %p43 = por %p41, %p42
    %s45 = sadd.s32 %s44, 1
    %p48 = scmp.eq.s32.totalorder %s10, 1
    %p49 = scmp.ne.s32.totalorder %s44, %s46
    %p50 = scmp.eq.s32.totalorder %s10, 0
    %p51 = por %p49, %p50
    %p52 = scmp.ne.s32.totalorder %s44, %s46
    %p53 = scmp.eq.s32.totalorder %s15, 1
    %p54 = por %p52, %p53
    %p55 = scmp.ne.s32.totalorder %s46, %s47
    %p56 = scmp.eq.s32.totalorder %s15, 0
    %p57 = por %p55, %p56
    %p58 = scmp.ne.s32.totalorder %s46, %s47
    %p59 = scmp.eq.s32.totalorder %s16, 1
    %p60 = por %p58, %p59
    %p62 = scmp.ne.s32.totalorder %s47, %s61
    %p63 = scmp.eq.s32.totalorder %s16, 0
    %p64 = por %p62, %p63
    %s66 = sadd.s32 %s65, 1
    %p69 = scmp.eq.s32.totalorder %s10, 1
    %p70 = scmp.ne.s32.totalorder %s65, %s67
    %p71 = scmp.eq.s32.totalorder %s10, 0
    %p72 = por %p70, %p71
    %p73 = scmp.ne.s32.totalorder %s65, %s67
    %p74 = scmp.eq.s32.totalorder %s15, 1
    %p75 = por %p73, %p74
    %p76 = scmp.ne.s32.totalorder %s67, %s68
    %p77 = scmp.eq.s32.totalorder %s15, 0
    %p78 = por %p76, %p77
    %p79 = scmp.ne.s32.totalorder %s67, %s68
    %p80 = scmp.eq.s32.totalorder %s16, 1
    %p81 = por %p79, %p80
    %p83 = scmp.ne.s32.totalorder %s68, %s82
    %p84 = scmp.eq.s32.totalorder %s16, 0
    %p85 = por %p83, %p84
    %s87 = sadd.s32 %s86, 1
    %p90 = scmp.eq.s32.totalorder %s10, 1
    %p91 = scmp.ne.s32.totalorder %s86, %s88
    %p92 = scmp.eq.s32.totalorder %s10, 0
    %p93 = por %p91, %p92
    %p94 = scmp.ne.s32.totalorder %s86, %s88
    %p95 = scmp.eq.s32.totalorder %s15, 1
    %p96 = por %p94, %p95
    %p97 = scmp.ne.s32.totalorder %s88, %s89
    %p98 = scmp.eq.s32.totalorder %s15, 0
    %p99 = por %p97, %p98
    %p100 = scmp.ne.s32.totalorder %s88, %s89
    %p101 = scmp.eq.s32.totalorder %s16, 1
    %p102 = por %p100, %p101
    %p104 = scmp.ne.s32.totalorder %s89, %s103
    %p105 = scmp.eq.s32.totalorder %s16, 0
    %p106 = por %p104, %p105
    %s107 = ssub.s32 %s10, %s17
    %p108 = scmp.eq.s32.totalorder %s107, 0
    %s110 = sadd.s32 %s109, 1
    %s111 = scalar_select %p108, %s109, %s110
    %p114 = pneg %p108
    %p115 = scmp.eq.s32.totalorder %s10, 1
    %p116 = por %p114, %p115
    %p117 = scmp.ne.s32.totalorder %s109, %s112
    %p118 = scmp.eq.s32.totalorder %s10, 0
    %p119 = por %p117, %p118
    %p120 = scmp.ne.s32.totalorder %s109, %s112
    %p121 = scmp.eq.s32.totalorder %s15, 1
    %p122 = por %p120, %p121
    %p123 = scmp.ne.s32.totalorder %s112, %s113
    %p124 = scmp.eq.s32.totalorder %s15, 0
    %p125 = por %p123, %p124
    %p126 = scmp.ne.s32.totalorder %s112, %s113
    %p127 = scmp.eq.s32.totalorder %s16, 1
    %p128 = por %p126, %p127
    %p130 = scmp.ne.s32.totalorder %s113, %s129
    %p131 = scmp.eq.s32.totalorder %s16, 0
    %p132 = por %p130, %p131
    %p133 = scmp.le.s32.totalorder 1, %s10
    %p134 = scmp.lt.s32.totalorder %s10, 3
    %p135 = pnand %p133, %p134
    %p136 = pneg %p135
    // Predicated region
    $region9: #{unet_dsv3_forward.1} parent=5 // pred_check
      _
    $region10: #{unet_dsv3_forward.1} parent=5 // pred_check_branch
      %138 = sbr.rel (%p135) target = $region12
    $region11: #{unet_dsv3_forward.1} parent=5 // pred_region
      %s139 = ssub.s32 %s10, 1
      // Predicated region
      $region13: #{unet_dsv3_forward.1} parent=11 // pred_check
        %p140 = pneg %p57
      $region14: #{unet_dsv3_forward.1} parent=11 // pred_check_branch
        %142 = sbr.rel (%p140) target = $region16
      $region15: #{unet_dsv3_forward.1} parent=11 // pred_region
        _
      $region16: #{unet_dsv3_forward.1} parent=11 // pred_fallthru
        _
      // Predicated region
      $region17: #{unet_dsv3_forward.1} parent=11 // pred_check
        %p143 = pneg %p78
      $region18: #{unet_dsv3_forward.1} parent=11 // pred_check_branch
        %145 = sbr.rel (%p143) target = $region20
      $region19: #{unet_dsv3_forward.1} parent=11 // pred_region
        _
      $region20: #{unet_dsv3_forward.1} parent=11 // pred_fallthru
        _
      // Predicated region
      $region21: #{unet_dsv3_forward.1} parent=11 // pred_check
        %p146 = pneg %p99
      $region22: #{unet_dsv3_forward.1} parent=11 // pred_check_branch
        %148 = sbr.rel (%p146) target = $region24
      $region23: #{unet_dsv3_forward.1} parent=11 // pred_region
        _
      $region24: #{unet_dsv3_forward.1} parent=11 // pred_fallthru
        _
    $region12: #{unet_dsv3_forward.1} parent=5 // pred_fallthru
      _
    %p149 = scmp.lt.s32.totalorder %s10, 2
    // Predicated region
    $region25: #{unet_dsv3_forward.1} parent=5 // pred_check
      %p150 = pneg %p149
    $region26: #{unet_dsv3_forward.1} parent=5 // pred_check_branch
      %152 = sbr.rel (%p150) target = $region28
    $region27: #{unet_dsv3_forward.1} parent=5 // pred_region
      // Predicated region
      $region29: #{unet_dsv3_forward.1} parent=27 // pred_check
        %p153 = pneg %p30
      $region30: #{unet_dsv3_forward.1} parent=27 // pred_check_branch
        %155 = sbr.rel (%p153) target = $region32
      $region31: #{unet_dsv3_forward.1} parent=27 // pred_region
        %p156 = scmp.lt.s32.totalorder %s10, 1
        %s157 = scalar_select %p156, %s10, 1
        %s158 = smul.addr %s157, 2
        %s159 = smul.addr %s158, 8
        %s160 = scalar_lea.vmem %s0, %s159
      $region32: #{unet_dsv3_forward.1} parent=27 // pred_fallthru
        _
    $region28: #{unet_dsv3_forward.1} parent=5 // pred_fallthru
      _
    %p161 = scmp.le.s32.totalorder 1, %s10
    %p162 = scmp.lt.s32.totalorder %s10, 3
    %p163 = pnand %p161, %p162
    %p164 = pneg %p163
    // Predicated region
    $region33: #{unet_dsv3_forward.1} parent=5 // pred_check
      _
    $region34: #{unet_dsv3_forward.1} parent=5 // pred_check_branch
      %166 = sbr.rel (%p163) target = $region36
    $region35: #{unet_dsv3_forward.1} parent=5 // pred_region
      %s167 = ssub.s32 %s10, 1
      %p168 = scmp.lt.s32.totalorder %s15, 1
      %s169 = scalar_select %p168, %s15, 1
      %s170 = smul.addr %s169, 2
      %s171 = smul.addr %s170, 8
      %s172 = scalar_lea.vmem %s0, %s171
      %p173 = pneg %p36
      %p174 = pneg %p33
      %p175 = pneg %p57
      %p176 = pneg %p54
      %p177 = pneg %p78
      %p178 = pneg %p75
      %p179 = pneg %p99
      %p180 = pneg %p96
      %p181 = pneg %p125
      %p182 = pneg %p122
      %p183 = scmp.lt.s32.totalorder %s15, 1
      %s184 = scalar_select %p183, %s15, 1
      %s185 = smul.addr %s184, 2
      %s186 = smul.addr %s185, 8
      %s187 = scalar_lea.vmem %s4, %s186
      %p188 = scmp.lt.s32.totalorder %s15, 1
      %s189 = scalar_select %p188, %s15, 1
      %s190 = smul.addr %s189, 2
      %s191 = smul.addr %s190, 8
      %s192 = scalar_lea.vmem %s0, %s191
      %p193 = scmp.lt.s32.totalorder %s15, 1
      %s194 = scalar_select %p193, %s15, 1
      %s195 = smul.addr %s194, 2
      %s196 = smul.addr %s195, 8
      %s197 = scalar_lea.vmem %s4, %s196
      %v198 = vld [vmem:[%s192] sm:$0xff]
      %v199 = vld [vmem:[%s192 + $0x8] sm:$0xff]
      %v200 = vld [vmem:[%s1] sm:$0xff]
      %v201 = vld [vmem:[%s1 + $0x8] sm:$0xff]
      %v202 = vld [vmem:[%s2] sm:$0xff]
      %v203 = vld [vmem:[%s2 + $0x8] sm:$0xff]
      %205 = vset.pattern.permute.xlu0 0
      %206 = vperm.xlu0 %205, %v202
      %v207 = vpop.permute.xlu0 %206
      %210 = vset.pattern.permute.xlu0 0
      %211 = vperm.xlu0 %210, %v203
      %v212 = vpop.permute.xlu0 %211
      %vm214 = vcmask 130048
      %v216 = vsel %vm214, %v200, 0
      %v219 = vsel %vm214, %v201, 0
      %221 = vmatprep.subr.mxu0 0.0
      %222 = vmatpush1.msra.mxu0 %v198
      %223 = vmatprep.subr.mxu0 0.0
      %224 = vmatpush1.msra.mxu0 %v199
      %225 = vmatprep.subr.mxu0 0.0
      %226 = vmatpush1.msra.mxu0 0.0
      %227 = vmatprep.subr.mxu0 0.0
      %228 = vmatpush1.msra.mxu0 0.0
      %229 = vmatprep.subr.mxu0 0.0
      %230 = vmatpush1.msra.mxu0 0.0
      %231 = vmatprep.subr.mxu0 0.0
      %232 = vmatpush1.msra.mxu0 0.0
      %233 = vmatprep.subr.mxu0 0.0
      %234 = vmatpush1.msra.mxu0 0.0
      %235 = vmatprep.subr.mxu0 0.0
      %236 = vmatpush1.msra.mxu0 0.0
      %237 = vmatprep.subr.mxu0 0.0
      %238 = vmatpush1.msra.mxu0 0.0
      %239 = vmatprep.subr.mxu0 0.0
      %240 = vmatpush1.msra.mxu0 0.0
      %241 = vmatprep.subr.mxu0 0.0
      %242 = vmatpush1.msra.mxu0 0.0
      %243 = vmatprep.subr.mxu0 0.0
      %244 = vmatpush1.msra.mxu0 0.0
      %245 = vmatprep.subr.mxu0 0.0
      %246 = vmatpush1.msra.mxu0 0.0
      %247 = vmatprep.subr.mxu0 0.0
      %248 = vmatpush1.msra.mxu0 0.0
      %249 = vmatprep.subr.mxu0 0.0
      %250 = vmatpush1.msra.mxu0 0.0
      %251 = vmatprep.subr.mxu0 0.0
      %252 = vmatpush1.msra.mxu0 0.0
      %253 = vmatprep.subr.mxu0 0.0
      %254 = vmatpush1.msra.mxu0 0.0
      %255 = vmatprep.subr.mxu0 0.0
      %256 = vmatpush1.msra.mxu0 0.0
      %257 = vmatprep.subr.mxu0 0.0
      %258 = vmatpush1.msra.mxu0 0.0
      %259 = vmatprep.subr.mxu0 0.0
      %260 = vmatpush1.msra.mxu0 0.0
      %261 = vmatprep.subr.mxu0 0.0
      %262 = vmatpush1.msra.mxu0 0.0
      %263 = vmatprep.subr.mxu0 0.0
      %264 = vmatpush1.msra.mxu0 0.0
      %265 = vmatprep.subr.mxu0 0.0
      %266 = vmatpush1.msra.mxu0 0.0
      %267 = vmatprep.subr.mxu0 0.0
      %268 = vmatpush1.msra.mxu0 0.0
      %269 = vmatprep.subr.mxu0 0.0
      %270 = vmatpush1.msra.mxu0 0.0
      %271 = vmatprep.subr.mxu0 0.0
      %272 = vmatpush1.msra.mxu0 0.0
      %273 = vmatprep.subr.mxu0 0.0
      %274 = vmatpush1.msra.mxu0 0.0
      %275 = vmatprep.subr.mxu0 0.0
      %276 = vmatpush1.msra.mxu0 0.0
      %277 = vmatprep.subr.mxu0 0.0
      %278 = vmatpush1.msra.mxu0 0.0
      %279 = vmatprep.subr.mxu0 0.0
      %280 = vmatpush1.msra.mxu0 0.0
      %281 = vmatprep.subr.mxu0 0.0
      %282 = vmatpush1.msra.mxu0 0.0
      %283 = vmatprep.subr.mxu0 0.0
      %284 = vmatpush1.msra.mxu0 0.0
      %285 = vmatprep.mubr.f32.mxu0 0.0
      %286 = vmatmul.mubr.f32.gmra.mrb[0].mxu0 %v216
      %v287 = vpop.f32.mrb[0].mxu0
      %v288 = vadd.f32 %v207, %v287
      %v289 = vpop.f32.mrb[0].mxu0
      %290 = vmatprep.mubr.f32.mxu0 0.0
      %291 = vmatmul.mubr.f32.gmra.mrb[0].mxu0 %v219
      %v292 = vpop.f32.mrb[0].mxu0
      %v293 = vadd.f32 %v212, %v292
      %v294 = vpop.f32.mrb[0].mxu0
      %295 = vdwg.mxu0
      %v296 = vld [vmem:[%s3] sm:$0xff]
      %v297 = vld [vmem:[%s3 + $0x8] sm:$0xff]
      %v299 = vsel %vm214, %v288, 0
      %v302 = vsel %vm214, %v293, 0
      %304 = vmatprep.subr.mxu0 0.0
      %305 = vmatpush1.msra.mxu0 %v296
      %306 = vmatprep.subr.mxu0 0.0
      %307 = vmatpush1.msra.mxu0 %v297
      %308 = vmatprep.subr.mxu0 0.0
      %309 = vmatpush1.msra.mxu0 0.0
      %310 = vmatprep.subr.mxu0 0.0
      %311 = vmatpush1.msra.mxu0 0.0
      %312 = vmatprep.subr.mxu0 0.0
      %313 = vmatpush1.msra.mxu0 0.0
      %314 = vmatprep.subr.mxu0 0.0
      %315 = vmatpush1.msra.mxu0 0.0
      %316 = vmatprep.subr.mxu0 0.0
      %317 = vmatpush1.msra.mxu0 0.0
      %318 = vmatprep.subr.mxu0 0.0
      %319 = vmatpush1.msra.mxu0 0.0
      %320 = vmatprep.subr.mxu0 0.0
      %321 = vmatpush1.msra.mxu0 0.0
      %322 = vmatprep.subr.mxu0 0.0
      %323 = vmatpush1.msra.mxu0 0.0
      %324 = vmatprep.subr.mxu0 0.0
      %325 = vmatpush1.msra.mxu0 0.0
      %326 = vmatprep.subr.mxu0 0.0
      %327 = vmatpush1.msra.mxu0 0.0
      %328 = vmatprep.subr.mxu0 0.0
      %329 = vmatpush1.msra.mxu0 0.0
      %330 = vmatprep.subr.mxu0 0.0
      %331 = vmatpush1.msra.mxu0 0.0
      %332 = vmatprep.subr.mxu0 0.0
      %333 = vmatpush1.msra.mxu0 0.0
      %334 = vmatprep.subr.mxu0 0.0
      %335 = vmatpush1.msra.mxu0 0.0
      %336 = vmatprep.subr.mxu0 0.0
      %337 = vmatpush1.msra.mxu0 0.0
      %338 = vmatprep.subr.mxu0 0.0
      %339 = vmatpush1.msra.mxu0 0.0
      %340 = vmatprep.subr.mxu0 0.0
      %341 = vmatpush1.msra.mxu0 0.0
      %342 = vmatprep.subr.mxu0 0.0
      %343 = vmatpush1.msra.mxu0 0.0
      %344 = vmatprep.subr.mxu0 0.0
      %345 = vmatpush1.msra.mxu0 0.0
      %346 = vmatprep.subr.mxu0 0.0
      %347 = vmatpush1.msra.mxu0 0.0
      %348 = vmatprep.subr.mxu0 0.0
      %349 = vmatpush1.msra.mxu0 0.0
      %350 = vmatprep.subr.mxu0 0.0
      %351 = vmatpush1.msra.mxu0 0.0
      %352 = vmatprep.subr.mxu0 0.0
      %353 = vmatpush1.msra.mxu0 0.0
      %354 = vmatprep.subr.mxu0 0.0
      %355 = vmatpush1.msra.mxu0 0.0
      %356 = vmatprep.subr.mxu0 0.0
      %357 = vmatpush1.msra.mxu0 0.0
      %358 = vmatprep.subr.mxu0 0.0
      %359 = vmatpush1.msra.mxu0 0.0
      %360 = vmatprep.subr.mxu0 0.0
      %361 = vmatpush1.msra.mxu0 0.0
      %362 = vmatprep.subr.mxu0 0.0
      %363 = vmatpush1.msra.mxu0 0.0
      %364 = vmatprep.subr.mxu0 0.0
      %365 = vmatpush1.msra.mxu0 0.0
      %366 = vmatprep.subr.mxu0 0.0
      %367 = vmatpush1.msra.mxu0 0.0
      %368 = vmatprep.mubr.f32.mxu0 0.0
      %369 = vmatmul.mubr.f32.gmra.mrb[0].mxu0 %v299
      %v370 = vpop.f32.mrb[0].mxu0
      %v371 = vadd.f32 0.0, %v370
      %v372 = vpop.f32.mrb[0].mxu0
      %373 = vmatprep.mubr.f32.mxu0 0.0
      %374 = vmatmul.mubr.f32.gmra.mrb[0].mxu0 %v302
      %v375 = vpop.f32.mrb[0].mxu0
      %v376 = vadd.f32 0.0, %v375
      %v377 = vpop.f32.mrb[0].mxu0
      %378 = vdwg.mxu0
      %vm379 = vcmask 523264
      %380 = vst.msk [vmem:[%s197] sm:$0xff] %vm379, %v371
      %381 = vst.msk [vmem:[%s197 + $0x8] sm:$0xff] %vm379, %v376
      %p382 = scmp.lt.s32.totalorder %s15, 1
      %s383 = scalar_select %p382, %s15, 1
      %s384 = smul.addr %s383, 2
      %s385 = smul.addr %s384, 8
      %s386 = scalar_lea.vmem %s4, %s385
      // Predicated region
      $region37: #{unet_dsv3_forward.1} parent=35 // pred_check
        %p387 = pneg %p122
      $region38: #{unet_dsv3_forward.1} parent=35 // pred_check_branch
        %389 = sbr.rel (%p387) target = $region40
      $region39: #{unet_dsv3_forward.1} parent=35 // pred_region
        _
      $region40: #{unet_dsv3_forward.1} parent=35 // pred_fallthru
        _
    $region36: #{unet_dsv3_forward.1} parent=5 // pred_fallthru
      _
    %p390 = scmp.le.s32.totalorder 2, %s10
    // Predicated region
    $region41: #{unet_dsv3_forward.1} parent=5 // pred_check
      %p391 = pneg %p390
    $region42: #{unet_dsv3_forward.1} parent=5 // pred_check_branch
      %393 = sbr.rel (%p391) target = $region44
    $region43: #{unet_dsv3_forward.1} parent=5 // pred_region
      %s394 = ssub.s32 %s10, 2
      // Predicated region
      $region45: #{unet_dsv3_forward.1} parent=43 // pred_check
        %p395 = pneg %p128
      $region46: #{unet_dsv3_forward.1} parent=43 // pred_check_branch
        %397 = sbr.rel (%p395) target = $region48
      $region47: #{unet_dsv3_forward.1} parent=43 // pred_region
        %p398 = scmp.lt.s32.totalorder %s16, 1
        %s399 = scalar_select %p398, %s16, 1
        %s400 = smul.addr %s399, 2
        %s401 = smul.addr %s400, 8
        %s402 = scalar_lea.vmem %s4, %s401
      $region48: #{unet_dsv3_forward.1} parent=43 // pred_fallthru
        _
    $region44: #{unet_dsv3_forward.1} parent=5 // pred_fallthru
      _
  $region6: #{unet_dsv3_forward.1} parent=0 // loop_footer
    %s14 = sadd.s32 1, %s10
  $region7: #{unet_dsv3_forward.1} parent=0 // loop_footer_branch
    %9 = sbr.rel target = $region3
  $region8: #{unet_dsv3_forward.1} parent=0 // loop_exit
    _

</llo_original>
